<compile_context>
chip_gen: v7x
topology: tpu7x:2x2x1
jax: 0.10.0
libtpu: 0.0.40
codegen_flags: <defaults>
</compile_context>

<pallas_src>
import functools
import math

import jax
import jax.numpy as jnp
import numpy as np
from jax import lax
from jax.experimental import pallas as pl
from jax.experimental.pallas import tpu as pltpu


MAX_PERIOD = 10000.0


def _timestep_embedder_kernel(t_ref, w1c_ref, w1s_ref, b1_ref, w2_ref, b2_ref,
                              o_ref, *, max_period):
    half = w1c_ref.shape[0]

    # Frequencies computed in-kernel: exp() lands on the otherwise-idle EUP.
    idx = lax.broadcasted_iota(jnp.int32, (1, half), 1).astype(jnp.float32)
    freqs = jnp.exp(idx * (-math.log(max_period) / half))        # (1, half) f32

    args = t_ref[...] * freqs                                    # (TM, half) f32
    cos = jnp.cos(args)
    sin = jnp.sin(args)

    # First Linear, split-K over the [cos | sin] halves (no concat slab).
    # bf16 operands, explicit f32 accumulation on the MXU.
    h = (jnp.dot(cos.astype(w1c_ref.dtype), w1c_ref[...],
                 preferred_element_type=jnp.float32)
         + jnp.dot(sin.astype(w1s_ref.dtype), w1s_ref[...],
                   preferred_element_type=jnp.float32)
         + b1_ref[...])

    # SiLU: h * sigmoid(h) = h * 1/(1 + exp(-h)). exp -> EUP, approx reciprocal
    # -> EUP; keeps the VPU divide slot free. Safe at extremes (inf -> 0, 0 -> h).
    h = h * pl.reciprocal(1.0 + jnp.exp(-h), approx=True)

    # Second Linear.
    o_ref[...] = (jnp.dot(h.astype(w2_ref.dtype), w2_ref[...],
                          preferred_element_type=jnp.float32)
                  + b2_ref[...])


def timestep_embedder(t, w1, b1, w2, b2, *,
                      frequency_embedding_size=256,
                      max_period=MAX_PERIOD,
                      tile_m=256,
                      compute_dtype=jnp.bfloat16):
    """DiT TimestepEmbedder forward.

    t  : (N,) float timesteps (may be fractional).
    w1 : (frequency_embedding_size, hidden)  == torch mlp[0].weight.T
    b1 : (hidden,)
    w2 : (hidden, hidden)                    == torch mlp[2].weight.T
    b2 : (hidden,)
    Returns (N, hidden) float32.
    """
    n = t.shape[0]
    half = frequency_embedding_size // 2
    hidden = w2.shape[1]

    # Row tile: a multiple of 8 (sublane), capped at tile_m; pad N so the tile
    # divides the (padded) batch exactly. Padded rows (t=0) are sliced off.
    tm = min(tile_m, ((n + 7) // 8) * 8)
    n_pad = ((n + tm - 1) // tm) * tm
    grid = (n_pad // tm,)

    t2d = jnp.zeros((n_pad, 1), jnp.float32).at[:n, 0].set(t.astype(jnp.float32))

    # Split first weight at the cos/sin boundary for the in-kernel split-K.
    # For odd frequency_embedding_size, PyTorch appends a zero embedding column
    # that multiplies w1[2*half]; it contributes nothing, so it is dropped.
    w1 = jnp.asarray(w1).astype(compute_dtype)
    w1_cos = w1[:half]
    w1_sin = w1[half:2 * half]
    w2c = jnp.asarray(w2).astype(compute_dtype)
    b1_2d = jnp.asarray(b1).reshape(1, hidden).astype(jnp.float32)
    b2_2d = jnp.asarray(b2).reshape(1, hidden).astype(jnp.float32)

    itemsize = jnp.dtype(compute_dtype).itemsize
    cost = pl.CostEstimate(
        flops=2 * n_pad * (2 * half * hidden + hidden * hidden),
        transcendentals=n_pad * (2 * half + 2 * hidden) + half,
        bytes_accessed=(t2d.size * 4
                        + (w1_cos.size + w1_sin.size + w2c.size) * itemsize
                        + (b1_2d.size + b2_2d.size) * 4
                        + n_pad * hidden * 4),
    )

    kernel = functools.partial(_timestep_embedder_kernel, max_period=max_period)

    out = pl.pallas_call(
        kernel,
        out_shape=jax.ShapeDtypeStruct((n_pad, hidden), jnp.float32),
        grid=grid,
        in_specs=[
            pl.BlockSpec((tm, 1), lambda i: (i, 0)),           # t: blocked rows
            pl.BlockSpec((half, hidden), lambda i: (0, 0)),    # w1 cos half (resident)
            pl.BlockSpec((half, hidden), lambda i: (0, 0)),    # w1 sin half (resident)
            pl.BlockSpec((1, hidden), lambda i: (0, 0)),       # b1 (resident)
            pl.BlockSpec((hidden, hidden), lambda i: (0, 0)),  # w2 (resident)
            pl.BlockSpec((1, hidden), lambda i: (0, 0)),       # b2 (resident)
        ],
        out_specs=pl.BlockSpec((tm, hidden), lambda i: (i, 0)),
        compiler_params=pltpu.CompilerParams(
            dimension_semantics=("parallel",)),
        cost_estimate=cost,
    )(t2d, w1_cos, w1_sin, b1_2d, w2c, b2_2d)

    return out[:n]


def _reference(t, w1, b1, w2, b2,
               frequency_embedding_size=256, max_period=MAX_PERIOD):
    """Pure-JAX f32 reference matching the PyTorch module."""
    half = frequency_embedding_size // 2
    freqs = jnp.exp(
        -math.log(max_period) * jnp.arange(half, dtype=jnp.float32) / half)
    args = t.astype(jnp.float32)[:, None] * freqs[None, :]
    emb = jnp.concatenate([jnp.cos(args), jnp.sin(args)], axis=-1)
    if frequency_embedding_size % 2:
        emb = jnp.concatenate([emb, jnp.zeros_like(emb[:, :1])], axis=-1)
    h = emb @ w1 + b1
    h = h * jax.nn.sigmoid(h)
    return h @ w2 + b2


if __name__ == "__main__":
    key = jax.random.PRNGKey(0)
    k_t, k_w1, k_b1, k_w2, k_b2 = jax.random.split(key, 5)

    FREQ = 256      # frequency_embedding_size (module default)
    HIDDEN = 128    # hidden_size (small, lane-dense)
    N = 20          # batch of timesteps (non-multiple of tile -> exercises padding)

    # Synthetic parameters, stored transposed so the kernel computes x @ W + b.
    w1 = jax.random.normal(k_w1, (FREQ, HIDDEN), jnp.float32) * 0.02
    b1 = jax.random.normal(k_b1, (HIDDEN,), jnp.float32) * 0.02
    w2 = jax.random.normal(k_w2, (HIDDEN, HIDDEN), jnp.float32) * 0.02
    b2 = jax.random.normal(k_b2, (HIDDEN,), jnp.float32) * 0.02

    # Fractional timesteps in [0, 1000).
    t = jax.random.uniform(k_t, (N,), jnp.float32, minval=0.0, maxval=1000.0)

    # tile_m=8 so the small demo batch still runs a multi-step grid (20 -> 24, 3 tiles).
    out = timestep_embedder(t, w1, b1, w2, b2,
                            frequency_embedding_size=FREQ, tile_m=8)
    out = jax.block_until_ready(out)

    ref = _reference(t, w1, b1, w2, b2, frequency_embedding_size=FREQ)
    # Tolerance accounts for bf16 weight/activation quantization at the MXU and
    # the approx EUP reciprocal in SiLU (accumulation is f32).
    np.testing.assert_allclose(np.asarray(out), np.asarray(ref),
                               rtol=5e-2, atol=1e-2)

    assert out.shape == (N, HIDDEN)
    print("KERNEL_OK")
</pallas_src>

<mosaic_0001>
module attributes {stable_mosaic.version = 11 : i64} {
  func.func @_timestep_embedder_kernel(%arg0: i32, %arg1: memref<8x1xf32, #tpu.memory_space<vmem>>, %arg2: memref<128x128xbf16, #tpu.memory_space<vmem>>, %arg3: memref<128x128xbf16, #tpu.memory_space<vmem>>, %arg4: memref<1x128xf32, #tpu.memory_space<vmem>>, %arg5: memref<128x128xbf16, #tpu.memory_space<vmem>>, %arg6: memref<1x128xf32, #tpu.memory_space<vmem>>, %arg7: memref<8x128xf32, #tpu.memory_space<vmem>>) attributes {dimension_semantics = [#tpu.dimension_semantics<parallel>], iteration_bounds = array<i64: 3>, scalar_prefetch = 0 : i64, scratch_operands = 0 : i64, tpu.core_type = #tpu.core_type<tc>, window_params = [{transform_indices = @transform_0, window_bounds = array<i64: 8, 1>}, {pipeline_mode = #tpu.pipeline_mode<synchronous>, transform_indices = @transform_1, window_bounds = array<i64: 128, 128>}, {pipeline_mode = #tpu.pipeline_mode<synchronous>, transform_indices = @transform_2, window_bounds = array<i64: 128, 128>}, {pipeline_mode = #tpu.pipeline_mode<synchronous>, transform_indices = @transform_3, window_bounds = array<i64: 1, 128>}, {pipeline_mode = #tpu.pipeline_mode<synchronous>, transform_indices = @transform_4, window_bounds = array<i64: 128, 128>}, {pipeline_mode = #tpu.pipeline_mode<synchronous>, transform_indices = @transform_5, window_bounds = array<i64: 1, 128>}, {transform_indices = @transform_6, window_bounds = array<i64: 8, 128>}]} {
    %0 = tpu.iota {dimensions = array<i32: 1>} : vector<1x128xi32>
    %1 = arith.sitofp %0 : vector<1x128xi32> to vector<1x128xf32>
    %cst = arith.constant -0.0719557852 : f32
    %2 = vector.broadcast %cst : f32 to vector<1x128xf32>
    %3 = arith.mulf %1, %2 : vector<1x128xf32>
    %4 = math.exp %3 : vector<1x128xf32>
    %c0 = arith.constant 0 : index
    %c0_0 = arith.constant 0 : index
    %5 = vector.load %arg1[%c0, %c0_0] : memref<8x1xf32, #tpu.memory_space<vmem>>, vector<8x1xf32>
    %6 = vector.broadcast %5 : vector<8x1xf32> to vector<8x128xf32>
    %7 = vector.broadcast %4 : vector<1x128xf32> to vector<8x128xf32>
    %8 = arith.mulf %6, %7 : vector<8x128xf32>
    %9 = math.cos %8 : vector<8x128xf32>
    %10 = math.sin %8 : vector<8x128xf32>
    %11 = arith.truncf %9 : vector<8x128xf32> to vector<8x128xbf16>
    %c0_1 = arith.constant 0 : index
    %c0_2 = arith.constant 0 : index
    %12 = vector.load %arg2[%c0_1, %c0_2] : memref<128x128xbf16, #tpu.memory_space<vmem>>, vector<128x128xbf16>
    %cst_3 = arith.constant dense<0.000000e+00> : vector<8x128xf32>
    %13 = tpu.matmul %11, %12, %cst_3 {dimension_numbers = #tpu.dot_dimension_numbers<[1], [0], [0], [1], [0, 0, 1, 1], [], []>} : vector<8x128xbf16>, vector<128x128xbf16>, vector<8x128xf32> -> vector<8x128xf32>
    %14 = arith.truncf %10 : vector<8x128xf32> to vector<8x128xbf16>
    %c0_4 = arith.constant 0 : index
    %c0_5 = arith.constant 0 : index
    %15 = vector.load %arg3[%c0_4, %c0_5] : memref<128x128xbf16, #tpu.memory_space<vmem>>, vector<128x128xbf16>
    %cst_6 = arith.constant dense<0.000000e+00> : vector<8x128xf32>
    %16 = tpu.matmul %14, %15, %cst_6 {dimension_numbers = #tpu.dot_dimension_numbers<[1], [0], [0], [1], [0, 0, 1, 1], [], []>} : vector<8x128xbf16>, vector<128x128xbf16>, vector<8x128xf32> -> vector<8x128xf32>
    %17 = arith.addf %13, %16 : vector<8x128xf32>
    %c0_7 = arith.constant 0 : index
    %c0_8 = arith.constant 0 : index
    %18 = vector.load %arg4[%c0_7, %c0_8] : memref<1x128xf32, #tpu.memory_space<vmem>>, vector<1x128xf32>
    %19 = vector.broadcast %18 : vector<1x128xf32> to vector<8x128xf32>
    %20 = arith.addf %17, %19 : vector<8x128xf32>
    %cst_9 = arith.constant 0.000000e+00 : f32
    %21 = vector.broadcast %cst_9 : f32 to vector<8x128xf32>
    %22 = arith.subf %21, %20 : vector<8x128xf32>
    %23 = math.exp %22 : vector<8x128xf32>
    %cst_10 = arith.constant 1.000000e+00 : f32
    %24 = vector.broadcast %cst_10 : f32 to vector<8x128xf32>
    %25 = arith.addf %24, %23 : vector<8x128xf32>
    %26 = tpu.reciprocal %25 {approx = true} : vector<8x128xf32> -> vector<8x128xf32>
    %27 = arith.mulf %20, %26 : vector<8x128xf32>
    %28 = arith.truncf %27 : vector<8x128xf32> to vector<8x128xbf16>
    %c0_11 = arith.constant 0 : index
    %c0_12 = arith.constant 0 : index
    %29 = vector.load %arg5[%c0_11, %c0_12] : memref<128x128xbf16, #tpu.memory_space<vmem>>, vector<128x128xbf16>
    %cst_13 = arith.constant dense<0.000000e+00> : vector<8x128xf32>
    %30 = tpu.matmul %28, %29, %cst_13 {dimension_numbers = #tpu.dot_dimension_numbers<[1], [0], [0], [1], [0, 0, 1, 1], [], []>} : vector<8x128xbf16>, vector<128x128xbf16>, vector<8x128xf32> -> vector<8x128xf32>
    %c0_14 = arith.constant 0 : index
    %c0_15 = arith.constant 0 : index
    %31 = vector.load %arg6[%c0_14, %c0_15] : memref<1x128xf32, #tpu.memory_space<vmem>>, vector<1x128xf32>
    %32 = vector.broadcast %31 : vector<1x128xf32> to vector<8x128xf32>
    %33 = arith.addf %30, %32 : vector<8x128xf32>
    %c0_16 = arith.constant 0 : index
    %c0_17 = arith.constant 0 : index
    %34 = vector.load %arg7[%c0_16, %c0_17] : memref<8x128xf32, #tpu.memory_space<vmem>>, vector<8x128xf32>
    tpu.vector_store %arg7[%c0_16, %c0_17], %33 {strides = array<i32>} : memref<8x128xf32, #tpu.memory_space<vmem>>, vector<8x128xf32>,
    return
  }
  func.func @transform_0(%arg0: i32) -> (i32, i32) {
    %c0_i32 = arith.constant 0 : i32
    %c0_i32_0 = arith.constant 0 : i32
    return %arg0, %c0_i32 : i32, i32
  }
  func.func @transform_1(%arg0: i32) -> (i32, i32) {
    %c0_i32 = arith.constant 0 : i32
    %c0_i32_0 = arith.constant 0 : i32
    %c0_i32_1 = arith.constant 0 : i32
    return %c0_i32, %c0_i32_0 : i32, i32
  }
  func.func @transform_2(%arg0: i32) -> (i32, i32) {
    %c0_i32 = arith.constant 0 : i32
    %c0_i32_0 = arith.constant 0 : i32
    %c0_i32_1 = arith.constant 0 : i32
    return %c0_i32, %c0_i32_0 : i32, i32
  }
  func.func @transform_3(%arg0: i32) -> (i32, i32) {
    %c0_i32 = arith.constant 0 : i32
    %c0_i32_0 = arith.constant 0 : i32
    %c0_i32_1 = arith.constant 0 : i32
    return %c0_i32, %c0_i32_0 : i32, i32
  }
  func.func @transform_4(%arg0: i32) -> (i32, i32) {
    %c0_i32 = arith.constant 0 : i32
    %c0_i32_0 = arith.constant 0 : i32
    %c0_i32_1 = arith.constant 0 : i32
    return %c0_i32, %c0_i32_0 : i32, i32
  }
  func.func @transform_5(%arg0: i32) -> (i32, i32) {
    %c0_i32 = arith.constant 0 : i32
    %c0_i32_0 = arith.constant 0 : i32
    %c0_i32_1 = arith.constant 0 : i32
    return %c0_i32, %c0_i32_0 : i32, i32
  }
  func.func @transform_6(%arg0: i32) -> (i32, i32) {
    %c0_i32 = arith.constant 0 : i32
    %c0_i32_0 = arith.constant 0 : i32
    return %arg0, %c0_i32 : i32, i32
  }
}

</mosaic_0001>

<llo_original>
// kernel: tpu_custom_call.1
$region0: #{tpu_custom_call.1}
  #allocation0 [shape = 'u32[]', space=smem, size = 0x4, offset = 0x4, fixed_abs, tag = 'smem constant byte address 0x4 - core index']
  #allocation1 [shape = 'u32[144,128]{1,0:T(1,128)}', space=vmem, size = 0x12000, scoped, tag = 'internal scratch']
  %s0 = inlined_call_operand.vmem [shape: f32[24,1], index: 0, kind: input, shape index: {}]
  %s1 = inlined_call_operand.hbm [shape: bf16[128,128], index: 1, kind: input, shape index: {}]
  %s2 = inlined_call_operand.hbm [shape: bf16[128,128], index: 2, kind: input, shape index: {}]
  %s3 = inlined_call_operand.vmem [shape: f32[1,128], index: 3, kind: input, shape index: {}]
  %s4 = inlined_call_operand.hbm [shape: bf16[128,128], index: 4, kind: input, shape index: {}]
  %s5 = inlined_call_operand.vmem [shape: f32[1,128], index: 5, kind: input, shape index: {}]
  %s6 = inlined_call_operand.hbm [shape: f32[24,128], index: 6, kind: output, shape index: {}]
  %s7 = sld [smem:[#allocation0]]
  $region69: #{tpu_custom_call.1} parent=0
    _
  %s9 = ssub.s32 1, %s7
  %s10 = scalar_select 0, %s9, %s7
  $region1: #{tpu_custom_call.1} parent=0
    #allocation2 [shape = 'u8[32768]{0}', space=vmem, size = 0x8000, scoped, tag = 'input window, operand 1, single buffered']
    #allocation3 [shape = 's32[2]{0}', space=sflag, size = 0x8, scoped, tag = 'scoped memory for tpu_custom_call.1']
    #allocation4 [shape = 's32[2]{0}', space=sflag, size = 0x8, scoped, tag = 'scoped memory for tpu_custom_call.1']
    #allocation5 [shape = 'u8[32768]{0}', space=vmem, size = 0x8000, scoped, tag = 'input window, operand 2, single buffered']
    #allocation6 [shape = 's32[1]{0}', space=sflag, size = 0x4, scoped, tag = 'scoped memory for tpu_custom_call.1']
    #allocation7 [shape = 'u8[32768]{0}', space=vmem, size = 0x8000, scoped, tag = 'input window, operand 4, single buffered']
    #allocation8 [shape = 'u8[8192]{0}', space=vmem, size = 0x2000, scoped, tag = 'output window, operand 0']
    %11 = vsyncpa [#allocation3], 0
    %12 = vsyncpa [#allocation6], 0
    %13 = vsyncpa [#allocation4], 0
    %s14 = scalar_lea.sflag [#allocation4], 1
    %15 = vsyncpa %s14, 0
    loop: start=0, step=1, limit=5
    $region2: #{tpu_custom_call.1} parent=1 // loop_pre_header
      _
    $region3: #{tpu_custom_call.1} parent=1 // loop_header
      %s17 = sphi 0, %s21
      %p18 = scmp.ge.s32.totalorder %s17, 5
      %s27 = sphi 0, %s29
      %s30 = sphi 0, %s27
      %s31 = sphi 0, %s30
      %s47 = sphi 0, %s31
      %s51 = sphi 0, %s51
      %s53 = sphi 0, %s51
      %s54 = sphi 0, %s53
      %s68 = sphi 0, %s54
      %s72 = sphi 0, %s72
      %s74 = sphi 0, %s72
      %s75 = sphi 0, %s74
      %s89 = sphi 0, %s75
      %s93 = sphi 0, %s93
      %s95 = sphi 0, %s93
      %s96 = sphi 0, %s95
      %s110 = sphi 0, %s96
      %s114 = sphi 0, %s114
      %s116 = sphi 0, %s114
      %s117 = sphi 0, %s116
      %s131 = sphi 0, %s117
      %s135 = sphi 0, %s135
      %s137 = sphi 0, %s135
      %s138 = sphi 0, %s137
      %s152 = sphi 0, %s138
      %s158 = sphi 0, %s160
      %s161 = sphi 0, %s158
      %s162 = sphi 0, %s161
      %s178 = sphi 0, %s162
    $region4: #{tpu_custom_call.1} parent=1 // loop_header_branch
      %20 = sbr.rel (%p18) target = $region8
    $region5: #{tpu_custom_call.1} parent=1 // loop_body
      %s22 = ssub.s32 %s17, 1
      %s23 = ssub.s32 %s17, 2
      %s24 = sadd.s32 %s17, 1
      %s25 = ssub.s32 %s17, %s24
      %p26 = scmp.eq.s32.totalorder %s25, 0
      %s28 = sadd.s32 %s27, 1
      %s29 = scalar_select %p26, %s27, %s28
      %p32 = pneg %p26
      %p33 = scmp.eq.s32.totalorder %s17, 2
      %p34 = por %p32, %p33
      %p35 = scmp.ne.s32.totalorder %s27, %s30
      %p36 = scmp.eq.s32.totalorder %s17, 0
      %p37 = por %p35, %p36
      %p38 = scmp.ne.s32.totalorder %s27, %s30
      %p39 = scmp.eq.s32.totalorder %s22, 2
      %p40 = por %p38, %p39
      %p41 = scmp.ne.s32.totalorder %s30, %s31
      %p42 = scmp.eq.s32.totalorder %s22, 0
      %p43 = por %p41, %p42
      %p44 = scmp.ne.s32.totalorder %s30, %s31
      %p45 = scmp.eq.s32.totalorder %s23, 2
      %p46 = por %p44, %p45
      %p48 = scmp.ne.s32.totalorder %s31, %s47
      %p49 = scmp.eq.s32.totalorder %s23, 0
      %p50 = por %p48, %p49
      %s52 = sadd.s32 %s51, 1
      %p55 = scmp.eq.s32.totalorder %s17, 2
      %p56 = scmp.ne.s32.totalorder %s51, %s53
      %p57 = scmp.eq.s32.totalorder %s17, 0
      %p58 = por %p56, %p57
      %p59 = scmp.ne.s32.totalorder %s51, %s53
      %p60 = scmp.eq.s32.totalorder %s22, 2
      %p61 = por %p59, %p60
      %p62 = scmp.ne.s32.totalorder %s53, %s54
      %p63 = scmp.eq.s32.totalorder %s22, 0
      %p64 = por %p62, %p63
      %p65 = scmp.ne.s32.totalorder %s53, %s54
      %p66 = scmp.eq.s32.totalorder %s23, 2
      %p67 = por %p65, %p66
      %p69 = scmp.ne.s32.totalorder %s54, %s68
      %p70 = scmp.eq.s32.totalorder %s23, 0
      %p71 = por %p69, %p70
      %s73 = sadd.s32 %s72, 1
      %p76 = scmp.eq.s32.totalorder %s17, 2
      %p77 = scmp.ne.s32.totalorder %s72, %s74
      %p78 = scmp.eq.s32.totalorder %s17, 0
      %p79 = por %p77, %p78
      %p80 = scmp.ne.s32.totalorder %s72, %s74
      %p81 = scmp.eq.s32.totalorder %s22, 2
      %p82 = por %p80, %p81
      %p83 = scmp.ne.s32.totalorder %s74, %s75
      %p84 = scmp.eq.s32.totalorder %s22, 0
      %p85 = por %p83, %p84
      %p86 = scmp.ne.s32.totalorder %s74, %s75
      %p87 = scmp.eq.s32.totalorder %s23, 2
      %p88 = por %p86, %p87
      %p90 = scmp.ne.s32.totalorder %s75, %s89
      %p91 = scmp.eq.s32.totalorder %s23, 0
      %p92 = por %p90, %p91
      %s94 = sadd.s32 %s93, 1
      %p97 = scmp.eq.s32.totalorder %s17, 2
      %p98 = scmp.ne.s32.totalorder %s93, %s95
      %p99 = scmp.eq.s32.totalorder %s17, 0
      %p100 = por %p98, %p99
      %p101 = scmp.ne.s32.totalorder %s93, %s95
      %p102 = scmp.eq.s32.totalorder %s22, 2
      %p103 = por %p101, %p102
      %p104 = scmp.ne.s32.totalorder %s95, %s96
      %p105 = scmp.eq.s32.totalorder %s22, 0
      %p106 = por %p104, %p105
      %p107 = scmp.ne.s32.totalorder %s95, %s96
      %p108 = scmp.eq.s32.totalorder %s23, 2
      %p109 = por %p107, %p108
      %p111 = scmp.ne.s32.totalorder %s96, %s110
      %p112 = scmp.eq.s32.totalorder %s23, 0
      %p113 = por %p111, %p112
      %s115 = sadd.s32 %s114, 1
      %p118 = scmp.eq.s32.totalorder %s17, 2
      %p119 = scmp.ne.s32.totalorder %s114, %s116
      %p120 = scmp.eq.s32.totalorder %s17, 0
      %p121 = por %p119, %p120
      %p122 = scmp.ne.s32.totalorder %s114, %s116
      %p123 = scmp.eq.s32.totalorder %s22, 2
      %p124 = por %p122, %p123
      %p125 = scmp.ne.s32.totalorder %s116, %s117
      %p126 = scmp.eq.s32.totalorder %s22, 0
      %p127 = por %p125, %p126
      %p128 = scmp.ne.s32.totalorder %s116, %s117
      %p129 = scmp.eq.s32.totalorder %s23, 2
      %p130 = por %p128, %p129
      %p132 = scmp.ne.s32.totalorder %s117, %s131
      %p133 = scmp.eq.s32.totalorder %s23, 0
      %p134 = por %p132, %p133
      %s136 = sadd.s32 %s135, 1
      %p139 = scmp.eq.s32.totalorder %s17, 2
      %p140 = scmp.ne.s32.totalorder %s135, %s137
      %p141 = scmp.eq.s32.totalorder %s17, 0
      %p142 = por %p140, %p141
      %p143 = scmp.ne.s32.totalorder %s135, %s137
      %p144 = scmp.eq.s32.totalorder %s22, 2
      %p145 = por %p143, %p144
      %p146 = scmp.ne.s32.totalorder %s137, %s138
      %p147 = scmp.eq.s32.totalorder %s22, 0
      %p148 = por %p146, %p147
      %p149 = scmp.ne.s32.totalorder %s137, %s138
      %p150 = scmp.eq.s32.totalorder %s23, 2
      %p151 = por %p149, %p150
      %p153 = scmp.ne.s32.totalorder %s138, %s152
      %p154 = scmp.eq.s32.totalorder %s23, 0
      %p155 = por %p153, %p154
      %s156 = ssub.s32 %s17, %s24
      %p157 = scmp.eq.s32.totalorder %s156, 0
      %s159 = sadd.s32 %s158, 1
      %s160 = scalar_select %p157, %s158, %s159
      %p163 = pneg %p157
      %p164 = scmp.eq.s32.totalorder %s17, 2
      %p165 = por %p163, %p164
      %p166 = scmp.ne.s32.totalorder %s158, %s161
      %p167 = scmp.eq.s32.totalorder %s17, 0
      %p168 = por %p166, %p167
      %p169 = scmp.ne.s32.totalorder %s158, %s161
      %p170 = scmp.eq.s32.totalorder %s22, 2
      %p171 = por %p169, %p170
      %p172 = scmp.ne.s32.totalorder %s161, %s162
      %p173 = scmp.eq.s32.totalorder %s22, 0
      %p174 = por %p172, %p173
      %p175 = scmp.ne.s32.totalorder %s161, %s162
      %p176 = scmp.eq.s32.totalorder %s23, 2
      %p177 = por %p175, %p176
      %p179 = scmp.ne.s32.totalorder %s162, %s178
      %p180 = scmp.eq.s32.totalorder %s23, 0
      %p181 = por %p179, %p180
      %p182 = scmp.le.s32.totalorder 1, %s17
      %p183 = scmp.lt.s32.totalorder %s17, 4
      %p184 = pnand %p182, %p183
      %p185 = pneg %p184
      // Predicated region
      $region9: #{tpu_custom_call.1} parent=5 // pred_check
        _
      $region10: #{tpu_custom_call.1} parent=5 // pred_check_branch
        %187 = sbr.rel (%p184) target = $region12
      $region11: #{tpu_custom_call.1} parent=5 // pred_region
        %s188 = ssub.s32 %s17, 1
        // Predicated region
        $region13: #{tpu_custom_call.1} parent=11 // pred_check
          %p189 = pneg %p64
        $region14: #{tpu_custom_call.1} parent=11 // pred_check_branch
          %191 = sbr.rel (%p189) target = $region16
        $region15: #{tpu_custom_call.1} parent=11 // pred_region
          %s193 = ssub.s32 1024, 1024
          %194 = vsyncadd [#allocation3], %s193
          %s195 = sshll.u32 [#allocation2], 4
          %s196 = int_to_ptr.vmem [resolvable:$true] %s195
          %201 = dma.hbm_to_vmem [thread:$0]  %s1, 1024, %s196, [#allocation3], 64, 64, 4
        $region16: #{tpu_custom_call.1} parent=11 // pred_fallthru
          _
        // Predicated region
        $region17: #{tpu_custom_call.1} parent=11 // pred_check
          %p202 = pneg %p85
        $region18: #{tpu_custom_call.1} parent=11 // pred_check_branch
          %204 = sbr.rel (%p202) target = $region20
        $region19: #{tpu_custom_call.1} parent=11 // pred_region
          %s206 = ssub.s32 1024, 1024
          %207 = vsyncadd [#allocation6], %s206
          %s208 = sshll.u32 [#allocation5], 4
          %s209 = int_to_ptr.vmem [resolvable:$true] %s208
          %214 = dma.hbm_to_vmem [thread:$0]  %s2, 1024, %s209, [#allocation6], 64, 64, 4
        $region20: #{tpu_custom_call.1} parent=11 // pred_fallthru
          _
        // Predicated region
        $region21: #{tpu_custom_call.1} parent=11 // pred_check
          %p215 = pneg %p106
        $region22: #{tpu_custom_call.1} parent=11 // pred_check_branch
          %217 = sbr.rel (%p215) target = $region24
        $region23: #{tpu_custom_call.1} parent=11 // pred_region
          _
        $region24: #{tpu_custom_call.1} parent=11 // pred_fallthru
          _
        // Predicated region
        $region25: #{tpu_custom_call.1} parent=11 // pred_check
          %p218 = pneg %p127
        $region26: #{tpu_custom_call.1} parent=11 // pred_check_branch
          %220 = sbr.rel (%p218) target = $region28
        $region27: #{tpu_custom_call.1} parent=11 // pred_region
          %s222 = ssub.s32 1024, 1024
          %223 = vsyncadd [#allocation6], %s222
          %s224 = sshll.u32 [#allocation7], 4
          %s225 = int_to_ptr.vmem [resolvable:$true] %s224
          %230 = dma.hbm_to_vmem [thread:$0]  %s4, 1024, %s225, [#allocation6], 64, 64, 4
        $region28: #{tpu_custom_call.1} parent=11 // pred_fallthru
          _
        // Predicated region
        $region29: #{tpu_custom_call.1} parent=11 // pred_check
          %p231 = pneg %p148
        $region30: #{tpu_custom_call.1} parent=11 // pred_check_branch
          %233 = sbr.rel (%p231) target = $region32
        $region31: #{tpu_custom_call.1} parent=11 // pred_region
          _
        $region32: #{tpu_custom_call.1} parent=11 // pred_fallthru
          _
      $region12: #{tpu_custom_call.1} parent=5 // pred_fallthru
        _
      %p234 = scmp.lt.s32.totalorder %s17, 3
      // Predicated region
      $region33: #{tpu_custom_call.1} parent=5 // pred_check
        %p235 = pneg %p234
      $region34: #{tpu_custom_call.1} parent=5 // pred_check_branch
        %237 = sbr.rel (%p235) target = $region36
      $region35: #{tpu_custom_call.1} parent=5 // pred_region
        // Predicated region
        $region37: #{tpu_custom_call.1} parent=35 // pred_check
          %p238 = pneg %p37
        $region38: #{tpu_custom_call.1} parent=35 // pred_check_branch
          %240 = sbr.rel (%p238) target = $region40
        $region39: #{tpu_custom_call.1} parent=35 // pred_region
          %p241 = scmp.lt.s32.totalorder %s17, 2
          %s242 = scalar_select %p241, %s17, 2
          %s243 = smul.addr %s242, 8
          %s244 = scalar_lea.vmem %s0, %s243
        $region40: #{tpu_custom_call.1} parent=35 // pred_fallthru
          _
      $region36: #{tpu_custom_call.1} parent=5 // pred_fallthru
        _
      %p245 = scmp.le.s32.totalorder 1, %s17
      %p246 = scmp.lt.s32.totalorder %s17, 4
      %p247 = pnand %p245, %p246
      %p248 = pneg %p247
      // Predicated region
      $region41: #{tpu_custom_call.1} parent=5 // pred_check
        _
      $region42: #{tpu_custom_call.1} parent=5 // pred_check_branch
        %250 = sbr.rel (%p247) target = $region44
      $region43: #{tpu_custom_call.1} parent=5 // pred_region
        %s251 = ssub.s32 %s17, 1
        // Predicated region
        $region45: #{tpu_custom_call.1} parent=43 // pred_check
          %p252 = pneg %p64
        $region46: #{tpu_custom_call.1} parent=43 // pred_check_branch
          %254 = sbr.rel (%p252) target = $region48
        $region47: #{tpu_custom_call.1} parent=43 // pred_region
          %255 = dma.done [#allocation3], 1024
        $region48: #{tpu_custom_call.1} parent=43 // pred_fallthru
          _
        // Predicated region
        $region49: #{tpu_custom_call.1} parent=43 // pred_check
          %p256 = pneg %p85
        $region50: #{tpu_custom_call.1} parent=43 // pred_check_branch
          %258 = sbr.rel (%p256) target = $region52
        $region51: #{tpu_custom_call.1} parent=43 // pred_region
          %259 = dma.done [#allocation6], 1024
        $region52: #{tpu_custom_call.1} parent=43 // pred_fallthru
          _
        // Predicated region
        $region53: #{tpu_custom_call.1} parent=43 // pred_check
          %p260 = pneg %p127
        $region54: #{tpu_custom_call.1} parent=43 // pred_check_branch
          %262 = sbr.rel (%p260) target = $region56
        $region55: #{tpu_custom_call.1} parent=43 // pred_region
          %263 = dma.done [#allocation6], 1024
        $region56: #{tpu_custom_call.1} parent=43 // pred_fallthru
          _
        %p264 = scmp.lt.s32.totalorder %s22, 2
        %s265 = scalar_select %p264, %s22, 2
        %s266 = smul.addr %s265, 8
        %s267 = scalar_lea.vmem %s0, %s266
        %p268 = pneg %p43
        %p269 = pneg %p40
        %p270 = pneg %p64
        %p271 = pneg %p61
        %p272 = pneg %p85
        %p273 = pneg %p82
        %p274 = pneg %p106
        %p275 = pneg %p103
        %p276 = pneg %p127
        %p277 = pneg %p124
        %p278 = pneg %p148
        %p279 = pneg %p145
        %p280 = pneg %p174
        %p281 = pneg %p171
        %s282 = sand.u32 %s161, 1
        %s283 = scalar_lea.sflag [#allocation4], %s282
        %s284 = sand.u32 %s161, 1
        %s285 = smul.addr %s284, 8
        %s286 = scalar_lea.vmem [#allocation8], %s285
        %p287 = scmp.lt.s32.totalorder %s22, 2
        %s288 = scalar_select %p287, %s22, 2
        %s289 = smul.addr %s288, 8
        %s290 = scalar_lea.vmem %s0, %s289
        %v292 = vlaneseq
        %v293 = vand.u32 %v292, 127
        %v294 = vcvt.s32.f32 %v293
        %v295 = vmul.f32 %v294, -0.071955785
        %v296 = vmul.f32 %v295, 1.442695
        %v297 = vpow.pop %v296
        %v298 = vld [vmem:[%s290] sm:$0xff]
        %300 = vset.pattern.permute.xlu0 0
        %301 = vperm.xlu0 %300, %v298
        %v302 = vpop.permute.xlu0 %301
        %v304 = vmul.f32 %v302, %v297
        %v305 = vand.u32 2147483647, %v304
        %vm306 = vcmp.le.f32.partialorder %v305, 0.7853982
        %vm307 = vcmp.lt.s32.totalorder %v304, 0
        %v308 = vand.u32 %v304, 2139095040
        %v309 = vshrl.u32 %v308, 23
        %v310 = vsub.s32 %v309, 127
        %v311 = vand.u32 2147483647, %v304
        %v312 = vand.u32 %v311, 8388607
        %v313 = vor.u32 %v312, 8388608
        %v314 = vsub.s32 0, %v313
        %v315 = vadd.s32 %v310, 1
        %vm316 = vcmp.gt.s32.totalorder %v315, 0
        %v317 = vsel %vm316, %v315, 0
        %v318 = vshrl.u32 %v317, 5
        %v319 = vand.u32 %v317, 31
        %v320 = vsub.s32 32, %v319
        %v321 = vshrl.u32 683565275, %v320
        %v322 = vshll.u32 683565275, %v319
        %v323 = vshrl.u32 2475754826, %v320
        %v324 = vor.u32 %v322, %v323
        %v325 = vshll.u32 2475754826, %v319
        %v326 = vshrl.u32 2131351028, %v320
        %v327 = vor.u32 %v325, %v326
        %v328 = vshll.u32 2131351028, %v319
        %v329 = vshrl.u32 2102212464, %v320
        %v330 = vor.u32 %v328, %v329
        %v331 = vshll.u32 2102212464, %v319
        %v332 = vshrl.u32 920167782, %v320
        %v333 = vor.u32 %v331, %v332
        %v334 = vshll.u32 920167782, %v319
        %v335 = vshrl.u32 1326507024, %v320
        %v336 = vor.u32 %v334, %v335
        %vm337 = vcmp.lt.s32.totalorder %v318, 1
        %vm338 = vcmp.lt.s32.totalorder %v318, 2
        %vm339 = vcmp.lt.s32.totalorder %v318, 3
        %vm340 = vcmp.lt.s32.totalorder %v318, 4
        %v341 = vsel %vm337, %v321, %v324
        %v342 = vsel %vm340, %v330, 2102212464
        %v343 = vsel %vm339, %v327, %v342
        %v344 = vsel %vm338, %v341, %v343
        %v345 = vsel %vm337, %v324, %v327
        %v346 = vsel %vm340, %v333, 920167782
        %v347 = vsel %vm339, %v330, %v346
        %v348 = vsel %vm338, %v345, %v347
        %v349 = vsel %vm337, %v327, %v330
        %v350 = vsel %vm340, %v336, 1326507024
        %v351 = vsel %vm339, %v333, %v350
        %v352 = vsel %vm338, %v349, %v351
        %v353 = vshll.u32 %v313, 8
        %v354 = vmul.u32.u64.compose %v353, %v352
        %v355 = vextract.low.u32 %v354
        %v356 = vextract.high.u32 %v354
        %v357 = vmul.u32.u64.compose %v353, %v348
        %v358 = vextract.low.u32 %v357
        %v359 = vextract.high.u32 %v357
        %v360 = vmul.u32 %v353, %v344
        %v361 = vadd.s32 %v356, %v358
        %vm362 = vc.u32 %v356, %v358
        %v363 = vadd.s32 %v359, 1
        %v364 = vsel %vm362, %v363, %v359
        %v365 = vadd.s32 %v360, %v364
        %v366 = vadd.s32 %v365, 536870912
        %v367 = vshrl.u32 %v366, 30
        %v368 = vshll.u32 %v367, 30
        %v369 = vsub.s32 %v365, %v368
        %vm370 = vcmp.lt.s32.totalorder %v369, 0
        %v371 = vsub.s32 0, %v369
        %v372 = vsel %vm370, %v371, %v369
        %v373 = vclz %v372
        %v374 = vsub.s32 %v373, 2
        %vm375 = vcmp.gt.s32.totalorder 0, %v374
        %v376 = vsel %vm375, 0, %v374
        %v377 = vsub.s32 32, %v376
        %v378 = vshll.u32 %v369, %v376
        %v379 = vshrl.u32 %v361, %v377
        %v380 = vor.u32 %v378, %v379
        %v381 = vsub.s32 4294967266, %v376
        %v382 = vadd.s32 %v381, 127
        %v383 = vshll.u32 %v382, 23
        %v384 = vor.u32 4788187, %v383
        %v385 = vand.u32 2147483647, %v384
        %v387 = vcvt.s32.f32 %v380
        %v388 = vmul.f32 %v387, %v385
        %v389 = vxor.u32 %v388, 2147483648
        %v390 = vsel %vm307, %v389, %v388
        %v391 = vsub.s32 4, %v367
        %v392 = vsel %vm307, %v391, %v367
        %v393 = vsel %vm306, %v304, %v390
        %v394 = vsel %vm306, 0, %v392
        %v395 = vcosq.f32.pop %v393
        %v396 = vsinq.f32.pop %v393
        %vm397 = vweird.f32 %v304
        %v398 = vand.u32 %v394, 3
        %vm399 = vcmp.lt.s32.totalorder %v398, 2
        %vm400 = vcmp.eq.s32.totalorder %v398, 0
        %v401 = vxor.u32 %v396, 2147483648
        %v402 = vsel %vm400, %v395, %v401
        %vm403 = vcmp.eq.s32.totalorder %v398, 2
        %v404 = vxor.u32 %v395, 2147483648
        %v405 = vsel %vm403, %v404, %v396
        %v406 = vsel %vm399, %v402, %v405
        %v407 = vsel %vm397, nan, %v406
        %v408 = vand.u32 2147483647, %v304
        %vm409 = vcmp.le.f32.partialorder %v408, 0.7853982
        %vm410 = vcmp.lt.s32.totalorder %v304, 0
        %v411 = vand.u32 %v304, 2139095040
        %v412 = vshrl.u32 %v411, 23
        %v413 = vsub.s32 %v412, 127
        %v414 = vand.u32 2147483647, %v304
        %v415 = vand.u32 %v414, 8388607
        %v416 = vor.u32 %v415, 8388608
        %v417 = vsub.s32 0, %v416
        %v418 = vadd.s32 %v413, 1
        %vm419 = vcmp.gt.s32.totalorder %v418, 0
        %v420 = vsel %vm419, %v418, 0
        %v421 = vshrl.u32 %v420, 5
        %v422 = vand.u32 %v420, 31
        %v423 = vsub.s32 32, %v422
        %v424 = vshrl.u32 683565275, %v423
        %v425 = vshll.u32 683565275, %v422
        %v426 = vshrl.u32 2475754826, %v423
        %v427 = vor.u32 %v425, %v426
        %v428 = vshll.u32 2475754826, %v422
        %v429 = vshrl.u32 2131351028, %v423
        %v430 = vor.u32 %v428, %v429
        %v431 = vshll.u32 2131351028, %v422
        %v432 = vshrl.u32 2102212464, %v423
        %v433 = vor.u32 %v431, %v432
        %v434 = vshll.u32 2102212464, %v422
        %v435 = vshrl.u32 920167782, %v423
        %v436 = vor.u32 %v434, %v435
        %v437 = vshll.u32 920167782, %v422
        %v438 = vshrl.u32 1326507024, %v423
        %v439 = vor.u32 %v437, %v438
        %vm440 = vcmp.lt.s32.totalorder %v421, 1
        %vm441 = vcmp.lt.s32.totalorder %v421, 2
        %vm442 = vcmp.lt.s32.totalorder %v421, 3
        %vm443 = vcmp.lt.s32.totalorder %v421, 4
        %v444 = vsel %vm440, %v424, %v427
        %v445 = vsel %vm443, %v433, 2102212464
        %v446 = vsel %vm442, %v430, %v445
        %v447 = vsel %vm441, %v444, %v446
        %v448 = vsel %vm440, %v427, %v430
        %v449 = vsel %vm443, %v436, 920167782
        %v450 = vsel %vm442, %v433, %v449
        %v451 = vsel %vm441, %v448, %v450
        %v452 = vsel %vm440, %v430, %v433
        %v453 = vsel %vm443, %v439, 1326507024
        %v454 = vsel %vm442, %v436, %v453
        %v455 = vsel %vm441, %v452, %v454
        %v456 = vshll.u32 %v416, 8
        %v457 = vmul.u32.u64.compose %v456, %v455
        %v458 = vextract.low.u32 %v457
        %v459 = vextract.high.u32 %v457
        %v460 = vmul.u32.u64.compose %v456, %v451
        %v461 = vextract.low.u32 %v460
        %v462 = vextract.high.u32 %v460
        %v463 = vmul.u32 %v456, %v447
        %v464 = vadd.s32 %v459, %v461
        %vm465 = vc.u32 %v459, %v461
        %v466 = vadd.s32 %v462, 1
        %v467 = vsel %vm465, %v466, %v462
        %v468 = vadd.s32 %v463, %v467
        %v469 = vadd.s32 %v468, 536870912
        %v470 = vshrl.u32 %v469, 30
        %v471 = vshll.u32 %v470, 30
        %v472 = vsub.s32 %v468, %v471
        %vm473 = vcmp.lt.s32.totalorder %v472, 0
        %v474 = vsub.s32 0, %v472
        %v475 = vsel %vm473, %v474, %v472
        %v476 = vclz %v475
        %v477 = vsub.s32 %v476, 2
        %vm478 = vcmp.gt.s32.totalorder 0, %v477
        %v479 = vsel %vm478, 0, %v477
        %v480 = vsub.s32 32, %v479
        %v481 = vshll.u32 %v472, %v479
        %v482 = vshrl.u32 %v464, %v480
        %v483 = vor.u32 %v481, %v482
        %v484 = vsub.s32 4294967266, %v479
        %v485 = vadd.s32 %v484, 127
        %v486 = vshll.u32 %v485, 23
        %v487 = vor.u32 4788187, %v486
        %v488 = vand.u32 2147483647, %v487
        %v490 = vcvt.s32.f32 %v483
        %v491 = vmul.f32 %v490, %v488
        %v492 = vxor.u32 %v491, 2147483648
        %v493 = vsel %vm410, %v492, %v491
        %v494 = vsub.s32 4, %v470
        %v495 = vsel %vm410, %v494, %v470
        %v496 = vsel %vm409, %v304, %v493
        %v497 = vsel %vm409, 0, %v495
        %v498 = vcosq.f32.pop %v496
        %v499 = vsinq.f32.pop %v496
        %vm500 = vweird.f32 %v304
        %v501 = vadd.s32 %v497, 3
        %v502 = vand.u32 %v501, 3
        %vm503 = vcmp.lt.s32.totalorder %v502, 2
        %vm504 = vcmp.eq.s32.totalorder %v502, 0
        %v505 = vxor.u32 %v499, 2147483648
        %v506 = vsel %vm504, %v498, %v505
        %vm507 = vcmp.eq.s32.totalorder %v502, 2
        %v508 = vxor.u32 %v498, 2147483648
        %v509 = vsel %vm507, %v508, %v499
        %v510 = vsel %vm503, %v506, %v509
        %v511 = vsel %vm500, nan, %v510
        %v512 = vpack.c.bf16 %v407, %v407
        %v513 = vld [vmem:[#allocation2] sm:$0xf]
        %v514 = vld [vmem:[#allocation2 + $0x4] sm:$0xf]
        %v515 = vld [vmem:[#allocation2 + $0x8] sm:$0xf]
        %v516 = vld [vmem:[#allocation2 + $0xc] sm:$0xf]
        %v517 = vld [vmem:[#allocation2 + $0x10] sm:$0xf]
        %v518 = vld [vmem:[#allocation2 + $0x14] sm:$0xf]
        %v519 = vld [vmem:[#allocation2 + $0x18] sm:$0xf]
        %v520 = vld [vmem:[#allocation2 + $0x1c] sm:$0xf]
        %v521 = vld [vmem:[#allocation2 + $0x20] sm:$0xf]
        %v522 = vld [vmem:[#allocation2 + $0x24] sm:$0xf]
        %v523 = vld [vmem:[#allocation2 + $0x28] sm:$0xf]
        %v524 = vld [vmem:[#allocation2 + $0x2c] sm:$0xf]
        %v525 = vld [vmem:[#allocation2 + $0x30] sm:$0xf]
        %v526 = vld [vmem:[#allocation2 + $0x34] sm:$0xf]
        %v527 = vld [vmem:[#allocation2 + $0x38] sm:$0xf]
        %v528 = vld [vmem:[#allocation2 + $0x3c] sm:$0xf]
        %v529 = vpack.c.bf16 %v511, %v511
        %v530 = vld [vmem:[#allocation5] sm:$0xf]
        %v531 = vld [vmem:[#allocation5 + $0x4] sm:$0xf]
        %v532 = vld [vmem:[#allocation5 + $0x8] sm:$0xf]
        %v533 = vld [vmem:[#allocation5 + $0xc] sm:$0xf]
        %v534 = vld [vmem:[#allocation5 + $0x10] sm:$0xf]
        %v535 = vld [vmem:[#allocation5 + $0x14] sm:$0xf]
        %v536 = vld [vmem:[#allocation5 + $0x18] sm:$0xf]
        %v537 = vld [vmem:[#allocation5 + $0x1c] sm:$0xf]
        %v538 = vld [vmem:[#allocation5 + $0x20] sm:$0xf]
        %v539 = vld [vmem:[#allocation5 + $0x24] sm:$0xf]
        %v540 = vld [vmem:[#allocation5 + $0x28] sm:$0xf]
        %v541 = vld [vmem:[#allocation5 + $0x2c] sm:$0xf]
        %v542 = vld [vmem:[#allocation5 + $0x30] sm:$0xf]
        %v543 = vld [vmem:[#allocation5 + $0x34] sm:$0xf]
        %v544 = vld [vmem:[#allocation5 + $0x38] sm:$0xf]
        %v545 = vld [vmem:[#allocation5 + $0x3c] sm:$0xf]
        %v562 = vunpack.c.l.b16 %v530
        %v563 = vunpack.c.l.b16 %v531
        %v564 = vunpack.c.l.b16 %v532
        %v565 = vunpack.c.l.b16 %v533
        %v566 = vunpack.c.l.b16 %v534
        %v567 = vunpack.c.l.b16 %v535
        %v568 = vunpack.c.l.b16 %v536
        %v569 = vunpack.c.l.b16 %v537
        %v570 = vunpack.c.l.b16 %v538
        %v571 = vunpack.c.l.b16 %v539
        %v572 = vunpack.c.l.b16 %v540
        %v573 = vunpack.c.l.b16 %v541
        %v574 = vunpack.c.l.b16 %v542
        %v575 = vunpack.c.l.b16 %v543
        %v576 = vunpack.c.l.b16 %v544
        %v577 = vunpack.c.l.b16 %v545
        %v578 = vpack.c.b16 %v563, %v562
        %v579 = vpack.c.b16 %v565, %v564
        %v580 = vpack.c.b16 %v567, %v566
        %v581 = vpack.c.b16 %v569, %v568
        %v582 = vpack.c.b16 %v571, %v570
        %v583 = vpack.c.b16 %v573, %v572
        %v584 = vpack.c.b16 %v575, %v574
        %v585 = vpack.c.b16 %v577, %v576
        %594 = vmatprep.subr.bf16.mxu0 0
        %595 = vmatpush1.bf16.msra.mxu0 %v578
        %596 = vmatprep.subr.bf16.mxu0 0
        %597 = vmatpush1.bf16.msra.mxu0 %v579
        %598 = vmatprep.subr.bf16.mxu0 0
        %599 = vmatpush1.bf16.msra.mxu0 %v580
        %600 = vmatprep.subr.bf16.mxu0 0
        %601 = vmatpush1.bf16.msra.mxu0 %v581
        %602 = vmatprep.subr.bf16.mxu0 0
        %603 = vmatpush1.bf16.msra.mxu0 %v582
        %604 = vmatprep.subr.bf16.mxu0 0
        %605 = vmatpush1.bf16.msra.mxu0 %v583
        %606 = vmatprep.subr.bf16.mxu0 0
        %607 = vmatpush1.bf16.msra.mxu0 %v584
        %608 = vmatprep.subr.bf16.mxu0 0
        %609 = vmatpush1.bf16.msra.mxu0 %v585
        %610 = vmatprep.subr.bf16.mxu0 0
        %611 = vmatpush1.bf16.msra.mxu0 0
        %612 = vmatprep.subr.bf16.mxu0 0
        %613 = vmatpush1.bf16.msra.mxu0 0
        %614 = vmatprep.subr.bf16.mxu0 0
        %615 = vmatpush1.bf16.msra.mxu0 0
        %616 = vmatprep.subr.bf16.mxu0 0
        %617 = vmatpush1.bf16.msra.mxu0 0
        %618 = vmatprep.subr.bf16.mxu0 0
        %619 = vmatpush1.bf16.msra.mxu0 0
        %620 = vmatprep.subr.bf16.mxu0 0
        %621 = vmatpush1.bf16.msra.mxu0 0
        %622 = vmatprep.subr.bf16.mxu0 0
        %623 = vmatpush1.bf16.msra.mxu0 0
        %624 = vmatprep.subr.bf16.mxu0 0
        %625 = vmatpush1.bf16.msra.mxu0 0
        %626 = vmatprep.mubr.bf16.mxu0 0
        %627 = vmatmul.mubr.bf16.gmra.mrb[0].mxu0 %v529
        %v628 = vpop.f32.mrb[0].mxu0
        %v629 = vadd.f32 0.0, %v628
        %v630 = vpop.f32.mrb[0].mxu0
        %v631 = vpop.f32.mrb[0].mxu0
        %v632 = vpop.f32.mrb[0].mxu0
        %633 = vdwg.mxu0
        %v650 = vunpack.c.l.b16 %v513
        %v651 = vunpack.c.l.b16 %v514
        %v652 = vunpack.c.l.b16 %v515
        %v653 = vunpack.c.l.b16 %v516
        %v654 = vunpack.c.l.b16 %v517
        %v655 = vunpack.c.l.b16 %v518
        %v656 = vunpack.c.l.b16 %v519
        %v657 = vunpack.c.l.b16 %v520
        %v658 = vunpack.c.l.b16 %v521
        %v659 = vunpack.c.l.b16 %v522
        %v660 = vunpack.c.l.b16 %v523
        %v661 = vunpack.c.l.b16 %v524
        %v662 = vunpack.c.l.b16 %v525
        %v663 = vunpack.c.l.b16 %v526
        %v664 = vunpack.c.l.b16 %v527
        %v665 = vunpack.c.l.b16 %v528
        %v666 = vpack.c.b16 %v651, %v650
        %v667 = vpack.c.b16 %v653, %v652
        %v668 = vpack.c.b16 %v655, %v654
        %v669 = vpack.c.b16 %v657, %v656
        %v670 = vpack.c.b16 %v659, %v658
        %v671 = vpack.c.b16 %v661, %v660
        %v672 = vpack.c.b16 %v663, %v662
        %v673 = vpack.c.b16 %v665, %v664
        %682 = vmatprep.subr.bf16.mxu0 0
        %683 = vmatpush1.bf16.msra.mxu0 %v666
        %684 = vmatprep.subr.bf16.mxu0 0
        %685 = vmatpush1.bf16.msra.mxu0 %v667
        %686 = vmatprep.subr.bf16.mxu0 0
        %687 = vmatpush1.bf16.msra.mxu0 %v668
        %688 = vmatprep.subr.bf16.mxu0 0
        %689 = vmatpush1.bf16.msra.mxu0 %v669
        %690 = vmatprep.subr.bf16.mxu0 0
        %691 = vmatpush1.bf16.msra.mxu0 %v670
        %692 = vmatprep.subr.bf16.mxu0 0
        %693 = vmatpush1.bf16.msra.mxu0 %v671
        %694 = vmatprep.subr.bf16.mxu0 0
        %695 = vmatpush1.bf16.msra.mxu0 %v672
        %696 = vmatprep.subr.bf16.mxu0 0
        %697 = vmatpush1.bf16.msra.mxu0 %v673
        %698 = vmatprep.subr.bf16.mxu0 0
        %699 = vmatpush1.bf16.msra.mxu0 0
        %700 = vmatprep.subr.bf16.mxu0 0
        %701 = vmatpush1.bf16.msra.mxu0 0
        %702 = vmatprep.subr.bf16.mxu0 0
        %703 = vmatpush1.bf16.msra.mxu0 0
        %704 = vmatprep.subr.bf16.mxu0 0
        %705 = vmatpush1.bf16.msra.mxu0 0
        %706 = vmatprep.subr.bf16.mxu0 0
        %707 = vmatpush1.bf16.msra.mxu0 0
        %708 = vmatprep.subr.bf16.mxu0 0
        %709 = vmatpush1.bf16.msra.mxu0 0
        %710 = vmatprep.subr.bf16.mxu0 0
        %711 = vmatpush1.bf16.msra.mxu0 0
        %712 = vmatprep.subr.bf16.mxu0 0
        %713 = vmatpush1.bf16.msra.mxu0 0
        %714 = vmatprep.mubr.bf16.mxu0 0
        %715 = vmatmul.mubr.bf16.gmra.mrb[0].mxu0 %v512
        %v716 = vpop.f32.mrb[0].mxu0
        %v717 = vadd.f32 %v629, %v716
        %v718 = vpop.f32.mrb[0].mxu0
        %v719 = vpop.f32.mrb[0].mxu0
        %v720 = vpop.f32.mrb[0].mxu0
        %721 = vdwg.mxu0
        %v722 = vld [vmem:[%s3] sm:$0x1]
        %v724 = vlaneseq
        %v725 = vshrl.u32 %v724, 7
        %v726 = vsub.s32 0, %v725
        %v727 = vrot.slane %v722, %v726
        %v729 = vadd.f32 %v717, %v727
        %v730 = vsub.f32 0.0, %v729
        %v731 = vmul.f32 %v730, 1.442695
        %v732 = vpow.pop %v731
        %v733 = vadd.f32 %v732, 1.0
        %v734 = vrcp.pop %v733
        %v735 = vmul.f32 %v729, %v734
        %v736 = vpack.c.bf16 %v735, %v735
        %v737 = vld [vmem:[#allocation7] sm:$0xf]
        %v738 = vld [vmem:[#allocation7 + $0x4] sm:$0xf]
        %v739 = vld [vmem:[#allocation7 + $0x8] sm:$0xf]
        %v740 = vld [vmem:[#allocation7 + $0xc] sm:$0xf]
        %v741 = vld [vmem:[#allocation7 + $0x10] sm:$0xf]
        %v742 = vld [vmem:[#allocation7 + $0x14] sm:$0xf]
        %v743 = vld [vmem:[#allocation7 + $0x18] sm:$0xf]
        %v744 = vld [vmem:[#allocation7 + $0x1c] sm:$0xf]
        %v745 = vld [vmem:[#allocation7 + $0x20] sm:$0xf]
        %v746 = vld [vmem:[#allocation7 + $0x24] sm:$0xf]
        %v747 = vld [vmem:[#allocation7 + $0x28] sm:$0xf]
        %v748 = vld [vmem:[#allocation7 + $0x2c] sm:$0xf]
        %v749 = vld [vmem:[#allocation7 + $0x30] sm:$0xf]
        %v750 = vld [vmem:[#allocation7 + $0x34] sm:$0xf]
        %v751 = vld [vmem:[#allocation7 + $0x38] sm:$0xf]
        %v752 = vld [vmem:[#allocation7 + $0x3c] sm:$0xf]
        %v753 = vld [vmem:[%s5] sm:$0x1]
        %v755 = vlaneseq
        %v756 = vshrl.u32 %v755, 7
        %v757 = vsub.s32 0, %v756
        %v758 = vrot.slane %v753, %v757
        %v776 = vunpack.c.l.b16 %v737
        %v777 = vunpack.c.l.b16 %v738
        %v778 = vunpack.c.l.b16 %v739
        %v779 = vunpack.c.l.b16 %v740
        %v780 = vunpack.c.l.b16 %v741
        %v781 = vunpack.c.l.b16 %v742
        %v782 = vunpack.c.l.b16 %v743
        %v783 = vunpack.c.l.b16 %v744
        %v784 = vunpack.c.l.b16 %v745
        %v785 = vunpack.c.l.b16 %v746
        %v786 = vunpack.c.l.b16 %v747
        %v787 = vunpack.c.l.b16 %v748
        %v788 = vunpack.c.l.b16 %v749
        %v789 = vunpack.c.l.b16 %v750
        %v790 = vunpack.c.l.b16 %v751
        %v791 = vunpack.c.l.b16 %v752
        %v792 = vpack.c.b16 %v777, %v776
        %v793 = vpack.c.b16 %v779, %v778
        %v794 = vpack.c.b16 %v781, %v780
        %v795 = vpack.c.b16 %v783, %v782
        %v796 = vpack.c.b16 %v785, %v784
        %v797 = vpack.c.b16 %v787, %v786
        %v798 = vpack.c.b16 %v789, %v788
        %v799 = vpack.c.b16 %v791, %v790
        %808 = vmatprep.subr.bf16.mxu0 0
        %809 = vmatpush1.bf16.msra.mxu0 %v792
        %810 = vmatprep.subr.bf16.mxu0 0
        %811 = vmatpush1.bf16.msra.mxu0 %v793
        %812 = vmatprep.subr.bf16.mxu0 0
        %813 = vmatpush1.bf16.msra.mxu0 %v794
        %814 = vmatprep.subr.bf16.mxu0 0
        %815 = vmatpush1.bf16.msra.mxu0 %v795
        %816 = vmatprep.subr.bf16.mxu0 0
        %817 = vmatpush1.bf16.msra.mxu0 %v796
        %818 = vmatprep.subr.bf16.mxu0 0
        %819 = vmatpush1.bf16.msra.mxu0 %v797
        %820 = vmatprep.subr.bf16.mxu0 0
        %821 = vmatpush1.bf16.msra.mxu0 %v798
        %822 = vmatprep.subr.bf16.mxu0 0
        %823 = vmatpush1.bf16.msra.mxu0 %v799
        %824 = vmatprep.subr.bf16.mxu0 0
        %825 = vmatpush1.bf16.msra.mxu0 0
        %826 = vmatprep.subr.bf16.mxu0 0
        %827 = vmatpush1.bf16.msra.mxu0 0
        %828 = vmatprep.subr.bf16.mxu0 0
        %829 = vmatpush1.bf16.msra.mxu0 0
        %830 = vmatprep.subr.bf16.mxu0 0
        %831 = vmatpush1.bf16.msra.mxu0 0
        %832 = vmatprep.subr.bf16.mxu0 0
        %833 = vmatpush1.bf16.msra.mxu0 0
        %834 = vmatprep.subr.bf16.mxu0 0
        %835 = vmatpush1.bf16.msra.mxu0 0
        %836 = vmatprep.subr.bf16.mxu0 0
        %837 = vmatpush1.bf16.msra.mxu0 0
        %838 = vmatprep.subr.bf16.mxu0 0
        %839 = vmatpush1.bf16.msra.mxu0 0
        %840 = vmatprep.mubr.bf16.mxu0 0
        %841 = vmatmul.mubr.bf16.gmra.mrb[0].mxu0 %v736
        %v842 = vpop.f32.mrb[0].mxu0
        %v843 = vadd.f32 %v758, %v842
        %v844 = vpop.f32.mrb[0].mxu0
        %v845 = vpop.f32.mrb[0].mxu0
        %v846 = vpop.f32.mrb[0].mxu0
        %847 = vdwg.mxu0
        %848 = vst [vmem:[%s286] sm:$0xff] %v843
        %s849 = sand.u32 %s161, 1
        %s850 = scalar_lea.sflag [#allocation4], %s849
        %s851 = sand.u32 %s161, 1
        %s852 = smul.addr %s851, 8
        %s853 = scalar_lea.vmem [#allocation8], %s852
        // Predicated region
        $region57: #{tpu_custom_call.1} parent=43 // pred_check
          %p854 = pneg %p171
        $region58: #{tpu_custom_call.1} parent=43 // pred_check_branch
          %856 = sbr.rel (%p854) target = $region60
        $region59: #{tpu_custom_call.1} parent=43 // pred_region
          %s858 = ssub.s32 128, 128
          %859 = vsyncadd %s850, %s858
          %s860 = smul.addr %s22, 128
          %s861 = scalar_lea.hbm %s6, %s860
          %s863 = sshll.u32 %s853, 4
          %s864 = int_to_ptr.vmem [resolvable:$true] %s863
          %866 = dma.vmem_to_hbm [thread:$0]  %s864, 128, %s861, %s850
        $region60: #{tpu_custom_call.1} parent=43 // pred_fallthru
          _
      $region44: #{tpu_custom_call.1} parent=5 // pred_fallthru
        _
      %p867 = scmp.le.s32.totalorder 2, %s17
      // Predicated region
      $region61: #{tpu_custom_call.1} parent=5 // pred_check
        %p868 = pneg %p867
      $region62: #{tpu_custom_call.1} parent=5 // pred_check_branch
        %870 = sbr.rel (%p868) target = $region64
      $region63: #{tpu_custom_call.1} parent=5 // pred_region
        %s871 = ssub.s32 %s17, 2
        // Predicated region
        $region65: #{tpu_custom_call.1} parent=63 // pred_check
          %p872 = pneg %p177
        $region66: #{tpu_custom_call.1} parent=63 // pred_check_branch
          %874 = sbr.rel (%p872) target = $region68
        $region67: #{tpu_custom_call.1} parent=63 // pred_region
          %s875 = sand.u32 %s162, 1
          %s876 = scalar_lea.sflag [#allocation4], %s875
          %s877 = sand.u32 %s162, 1
          %s878 = smul.addr %s877, 8
          %s879 = scalar_lea.vmem [#allocation8], %s878
          %880 = dma.done %s876, 128
        $region68: #{tpu_custom_call.1} parent=63 // pred_fallthru
          _
      $region64: #{tpu_custom_call.1} parent=5 // pred_fallthru
        _
    $region6: #{tpu_custom_call.1} parent=1 // loop_footer
      %s21 = sadd.s32 1, %s17
    $region7: #{tpu_custom_call.1} parent=1 // loop_footer_branch
      %16 = sbr.rel target = $region3
    $region8: #{tpu_custom_call.1} parent=1 // loop_exit
      _
    %881 = vsyncpa [#allocation3], 1
    %s882 = scalar_lea.sflag [#allocation3], 1
    %883 = vsyncpa %s882, 1
    %884 = vsyncpa [#allocation6], 1
    %885 = vsyncpa [#allocation4], 1
    %s886 = scalar_lea.sflag [#allocation4], 1
    %887 = vsyncpa %s886, 1

</llo_original>
